<compile_context>
chip_gen: v7x
topology: tpu7x:2x2x1
jax: 0.10.0
libtpu: 0.0.40
codegen_flags: <defaults>
</compile_context>

<pallas_src>
import jax
import jax.numpy as jnp
from jax.experimental import pallas as pl
from jax.experimental.pallas import tpu as pltpu

IN_FEATURES = 4
HIDDEN = 30
INTERMEDIATE = 25
ACTIONS = 2

MAX_TB = 32768  # ~18 MiB peak VMEM at this tile; fits the 32 MiB scoped limit.


def qnet_kernel(x_ref, w1_ref, b1_ref, w2_ref, b2_ref, w3_ref, b3_ref, o_ref):
    # x_ref : [4,  TB] f32    w1: [30, 4]  bf16   b1: [30, 1] f32
    # h1    : [30, TB] f32    w2: [25, 30] bf16   b2: [25, 1] f32
    # h2    : [25, TB] f32    w3: [ 2, 25] bf16   b3: [ 2, 1] f32
    # o_ref : [2,  TB] f32    (lane-dense: TB is a multiple of 128 or == B)
    x = x_ref[...].astype(jnp.bfloat16)

    h1 = jnp.dot(w1_ref[...], x, preferred_element_type=jnp.float32) + b1_ref[...]
    h1 = jnp.maximum(h1, 0.0).astype(jnp.bfloat16)

    h2 = jnp.dot(w2_ref[...], h1, preferred_element_type=jnp.float32) + b2_ref[...]
    h2 = jnp.maximum(h2, 0.0).astype(jnp.bfloat16)

    out = jnp.dot(w3_ref[...], h2, preferred_element_type=jnp.float32) + b3_ref[...]
    o_ref[...] = out.astype(o_ref.dtype)


def _resident_spec(shape):
    # Whole-array block with a constant index_map -> fetched once, stays in
    # VMEM across all batch-grid steps (weights / biases).
    return pl.BlockSpec(shape, lambda i: tuple(0 for _ in shape))


def _pick_tile(batch):
    """Batch-lane tile size.

    - batch <= 128: one whole-array block (no OOB lanes, trivial grid).
    - otherwise: as large as possible (amortizes the ~0.35us/step pipeline
      overhead) but capped at MAX_TB for VMEM, and sized from ceil(B/2) so the
      grid has >= 2 steps whenever the batch is large enough -- that lets the
      "parallel" axis feed both TensorCores on v7x (no effect on v5e/v6e).
    """
    if batch <= 128:
        return batch
    return max(128, min(MAX_TB, int(pl.next_power_of_2(pl.cdiv(batch, 2)))))


def qnet_apply_fm(x_fm, params, tb=None):
    """Primary, zero-relayout entry point.

    x_fm: [4, B] float32 (feature-major).  Returns [2, B] float32.
    No transpose / pad / slice copies are made around the kernel; the ragged
    last batch block (B not a multiple of tb) is masked by Mosaic.
    """
    f_in, batch = x_fm.shape
    assert f_in == IN_FEATURES, f"expected [{IN_FEATURES}, B] input, got {x_fm.shape}"
    if tb is None:
        tb = _pick_tile(batch)
    grid = (pl.cdiv(batch, tb),)

    # Weights in bf16 (MXU-native on v5e/v6e/v7x); biases stay f32 since the
    # accumulation / bias-add happens in f32.  Casting ~1k weight values here
    # is negligible; the weights are resident in VMEM across the whole grid.
    w1 = params["w1"].astype(jnp.bfloat16)
    w2 = params["w2"].astype(jnp.bfloat16)
    w3 = params["w3"].astype(jnp.bfloat16)
    b1, b2, b3 = params["b1"], params["b2"], params["b3"]

    return pl.pallas_call(
        qnet_kernel,
        out_shape=jax.ShapeDtypeStruct((ACTIONS, batch), jnp.float32),
        grid=grid,
        in_specs=[
            pl.BlockSpec((IN_FEATURES, tb), lambda i: (0, i)),   # x tile, pipelined
            _resident_spec(w1.shape), _resident_spec(b1.shape),
            _resident_spec(w2.shape), _resident_spec(b2.shape),
            _resident_spec(w3.shape), _resident_spec(b3.shape),
        ],
        out_specs=pl.BlockSpec((ACTIONS, tb), lambda i: (0, i)),  # lane-dense out
        compiler_params=pltpu.CompilerParams(
            # Batch axis is embarrassingly parallel -> lets v7x use both TCs;
            # harmless no-op on single-TC v5e/v6e.
            dimension_semantics=("parallel",),
            # Raise v5e's 16 MiB default scoped VMEM; 32 MiB is within the
            # physical budget of all three generations (v7x: 64 MiB / TC).
            vmem_limit_bytes=32 * 1024 * 1024,
        ),
    )(x_fm, w1, b1, w2, b2, w3, b3)


def qnet_forward(x, params, tb=None):
    """PyTorch-facing compatibility wrapper: x [B, 4] -> [B, 2].

    NOTE: each transpose here is a full HBM read+write of a bandwidth-bound
    op.  Production callers should keep activations feature-major and call
    qnet_apply_fm directly (zero relayout).
    """
    return jnp.transpose(qnet_apply_fm(jnp.transpose(x), params, tb=tb))


def init_params(key):
    """Mimics nn.Linear init: uniform(-1/sqrt(fan_in), 1/sqrt(fan_in)).
    Weights stored as [out, in] (PyTorch native); biases as [out, 1]."""
    def linear(key, fan_in, fan_out):
        kw, kb = jax.random.split(key)
        bound = 1.0 / jnp.sqrt(fan_in)
        w = jax.random.uniform(kw, (fan_out, fan_in), jnp.float32, -bound, bound)
        b = jax.random.uniform(kb, (fan_out, 1), jnp.float32, -bound, bound)
        return w, b

    k1, k2, k3 = jax.random.split(key, 3)
    w1, b1 = linear(k1, IN_FEATURES, HIDDEN)
    w2, b2 = linear(k2, HIDDEN, INTERMEDIATE)
    w3, b3 = linear(k3, INTERMEDIATE, ACTIONS)
    return {"w1": w1, "b1": b1, "w2": w2, "b2": b2, "w3": w3, "b3": b3}


def qnet_reference(x, params):
    # Plain-JAX f32 reference in the PyTorch convention: y = x @ W.T + b
    h1 = jnp.maximum(x @ params["w1"].T + params["b1"].T, 0.0)
    h2 = jnp.maximum(h1 @ params["w2"].T + params["b2"].T, 0.0)
    return h2 @ params["w3"].T + params["b3"].T


if __name__ == "__main__":
    key = jax.random.PRNGKey(0)
    kx, kp = jax.random.split(key)
    params = init_params(kp)

    # Small PyTorch-convention smoke test (B=8 rows of 4 features), exercising
    # the compatibility wrapper.  Tolerances are loosened for the bf16 MXU
    # operands (f32 accumulation).
    B = 8
    x = jax.random.normal(kx, (B, IN_FEATURES), jnp.float32)
    out = jax.block_until_ready(qnet_forward(x, params))
    ref = qnet_reference(x, params)
    assert out.shape == (B, ACTIONS)
    assert jnp.allclose(out, ref, atol=5e-2, rtol=5e-2), "mismatch vs reference"

    # Larger, non-tile-aligned batch through the zero-relayout feature-major
    # path: exercises a multi-step grid and the masked ragged last block.
    B2 = 5000
    x2_fm = jax.random.normal(kx, (IN_FEATURES, B2), jnp.float32)
    out2 = jax.block_until_ready(qnet_apply_fm(x2_fm, params))
    ref2 = jnp.transpose(qnet_reference(jnp.transpose(x2_fm), params))
    assert out2.shape == (ACTIONS, B2)
    assert jnp.allclose(out2, ref2, atol=5e-2, rtol=5e-2), "mismatch vs reference (large B)"

    print("KERNEL_OK")
</pallas_src>

<mosaic_0001>
module attributes {stable_mosaic.version = 11 : i64} {
  func.func @qnet_kernel(%arg0: i32, %arg1: memref<4x8xf32, #tpu.memory_space<vmem>>, %arg2: memref<30x4xbf16, #tpu.memory_space<vmem>>, %arg3: memref<30x1xf32, #tpu.memory_space<vmem>>, %arg4: memref<25x30xbf16, #tpu.memory_space<vmem>>, %arg5: memref<25x1xf32, #tpu.memory_space<vmem>>, %arg6: memref<2x25xbf16, #tpu.memory_space<vmem>>, %arg7: memref<2x1xf32, #tpu.memory_space<vmem>>, %arg8: memref<2x8xf32, #tpu.memory_space<vmem>>) attributes {dimension_semantics = [#tpu.dimension_semantics<parallel>], iteration_bounds = array<i64: 1>, scalar_prefetch = 0 : i64, scratch_operands = 0 : i64, tpu.core_type = #tpu.core_type<tc>, window_params = [{transform_indices = @transform_0, window_bounds = array<i64: 4, 8>}, {pipeline_mode = #tpu.pipeline_mode<synchronous>, transform_indices = @transform_1, window_bounds = array<i64: 30, 4>}, {pipeline_mode = #tpu.pipeline_mode<synchronous>, transform_indices = @transform_2, window_bounds = array<i64: 30, 1>}, {pipeline_mode = #tpu.pipeline_mode<synchronous>, transform_indices = @transform_3, window_bounds = array<i64: 25, 30>}, {pipeline_mode = #tpu.pipeline_mode<synchronous>, transform_indices = @transform_4, window_bounds = array<i64: 25, 1>}, {pipeline_mode = #tpu.pipeline_mode<synchronous>, transform_indices = @transform_5, window_bounds = array<i64: 2, 25>}, {pipeline_mode = #tpu.pipeline_mode<synchronous>, transform_indices = @transform_6, window_bounds = array<i64: 2, 1>}, {transform_indices = @transform_7, window_bounds = array<i64: 2, 8>}]} {
    %c0 = arith.constant 0 : index
    %c0_0 = arith.constant 0 : index
    %0 = vector.load %arg1[%c0, %c0_0] : memref<4x8xf32, #tpu.memory_space<vmem>>, vector<4x8xf32>
    %1 = arith.truncf %0 : vector<4x8xf32> to vector<4x8xbf16>
    %c0_1 = arith.constant 0 : index
    %c0_2 = arith.constant 0 : index
    %2 = vector.load %arg2[%c0_1, %c0_2] : memref<30x4xbf16, #tpu.memory_space<vmem>>, vector<30x4xbf16>
    %cst = arith.constant dense<0.000000e+00> : vector<30x8xf32>
    %3 = tpu.matmul %2, %1, %cst {dimension_numbers = #tpu.dot_dimension_numbers<[1], [0], [0], [1], [0, 0, 1, 1], [], []>} : vector<30x4xbf16>, vector<4x8xbf16>, vector<30x8xf32> -> vector<30x8xf32>
    %c0_3 = arith.constant 0 : index
    %c0_4 = arith.constant 0 : index
    %4 = vector.load %arg3[%c0_3, %c0_4] : memref<30x1xf32, #tpu.memory_space<vmem>>, vector<30x1xf32>
    %5 = vector.broadcast %4 : vector<30x1xf32> to vector<30x8xf32>
    %6 = arith.addf %3, %5 : vector<30x8xf32>
    %cst_5 = arith.constant 0.000000e+00 : f32
    %7 = vector.broadcast %cst_5 : f32 to vector<30x8xf32>
    %8 = arith.maximumf %6, %7 : vector<30x8xf32>
    %9 = arith.truncf %8 : vector<30x8xf32> to vector<30x8xbf16>
    %c0_6 = arith.constant 0 : index
    %c0_7 = arith.constant 0 : index
    %10 = vector.load %arg4[%c0_6, %c0_7] : memref<25x30xbf16, #tpu.memory_space<vmem>>, vector<25x30xbf16>
    %cst_8 = arith.constant dense<0.000000e+00> : vector<25x8xf32>
    %11 = tpu.matmul %10, %9, %cst_8 {dimension_numbers = #tpu.dot_dimension_numbers<[1], [0], [0], [1], [0, 0, 1, 1], [], []>} : vector<25x30xbf16>, vector<30x8xbf16>, vector<25x8xf32> -> vector<25x8xf32>
    %c0_9 = arith.constant 0 : index
    %c0_10 = arith.constant 0 : index
    %12 = vector.load %arg5[%c0_9, %c0_10] : memref<25x1xf32, #tpu.memory_space<vmem>>, vector<25x1xf32>
    %13 = vector.broadcast %12 : vector<25x1xf32> to vector<25x8xf32>
    %14 = arith.addf %11, %13 : vector<25x8xf32>
    %cst_11 = arith.constant 0.000000e+00 : f32
    %15 = vector.broadcast %cst_11 : f32 to vector<25x8xf32>
    %16 = arith.maximumf %14, %15 : vector<25x8xf32>
    %17 = arith.truncf %16 : vector<25x8xf32> to vector<25x8xbf16>
    %c0_12 = arith.constant 0 : index
    %c0_13 = arith.constant 0 : index
    %18 = vector.load %arg6[%c0_12, %c0_13] : memref<2x25xbf16, #tpu.memory_space<vmem>>, vector<2x25xbf16>
    %cst_14 = arith.constant dense<0.000000e+00> : vector<2x8xf32>
    %19 = tpu.matmul %18, %17, %cst_14 {dimension_numbers = #tpu.dot_dimension_numbers<[1], [0], [0], [1], [0, 0, 1, 1], [], []>} : vector<2x25xbf16>, vector<25x8xbf16>, vector<2x8xf32> -> vector<2x8xf32>
    %c0_15 = arith.constant 0 : index
    %c0_16 = arith.constant 0 : index
    %20 = vector.load %arg7[%c0_15, %c0_16] : memref<2x1xf32, #tpu.memory_space<vmem>>, vector<2x1xf32>
    %21 = vector.broadcast %20 : vector<2x1xf32> to vector<2x8xf32>
    %22 = arith.addf %19, %21 : vector<2x8xf32>
    %c0_17 = arith.constant 0 : index
    %c0_18 = arith.constant 0 : index
    %23 = vector.load %arg8[%c0_17, %c0_18] : memref<2x8xf32, #tpu.memory_space<vmem>>, vector<2x8xf32>
    tpu.vector_store %arg8[%c0_17, %c0_18], %22 {strides = array<i32>} : memref<2x8xf32, #tpu.memory_space<vmem>>, vector<2x8xf32>,
    return
  }
  func.func @transform_0(%arg0: i32) -> (i32, i32) {
    %c0_i32 = arith.constant 0 : i32
    %c0_i32_0 = arith.constant 0 : i32
    return %c0_i32, %arg0 : i32, i32
  }
  func.func @transform_1(%arg0: i32) -> (i32, i32) {
    %c0_i32 = arith.constant 0 : i32
    %c0_i32_0 = arith.constant 0 : i32
    %c0_i32_1 = arith.constant 0 : i32
    return %c0_i32, %c0_i32_0 : i32, i32
  }
  func.func @transform_2(%arg0: i32) -> (i32, i32) {
    %c0_i32 = arith.constant 0 : i32
    %c0_i32_0 = arith.constant 0 : i32
    %c0_i32_1 = arith.constant 0 : i32
    return %c0_i32, %c0_i32_0 : i32, i32
  }
  func.func @transform_3(%arg0: i32) -> (i32, i32) {
    %c0_i32 = arith.constant 0 : i32
    %c0_i32_0 = arith.constant 0 : i32
    %c0_i32_1 = arith.constant 0 : i32
    return %c0_i32, %c0_i32_0 : i32, i32
  }
  func.func @transform_4(%arg0: i32) -> (i32, i32) {
    %c0_i32 = arith.constant 0 : i32
    %c0_i32_0 = arith.constant 0 : i32
    %c0_i32_1 = arith.constant 0 : i32
    return %c0_i32, %c0_i32_0 : i32, i32
  }
  func.func @transform_5(%arg0: i32) -> (i32, i32) {
    %c0_i32 = arith.constant 0 : i32
    %c0_i32_0 = arith.constant 0 : i32
    %c0_i32_1 = arith.constant 0 : i32
    return %c0_i32, %c0_i32_0 : i32, i32
  }
  func.func @transform_6(%arg0: i32) -> (i32, i32) {
    %c0_i32 = arith.constant 0 : i32
    %c0_i32_0 = arith.constant 0 : i32
    %c0_i32_1 = arith.constant 0 : i32
    return %c0_i32, %c0_i32_0 : i32, i32
  }
  func.func @transform_7(%arg0: i32) -> (i32, i32) {
    %c0_i32 = arith.constant 0 : i32
    %c0_i32_0 = arith.constant 0 : i32
    return %c0_i32, %arg0 : i32, i32
  }
}

</mosaic_0001>

<llo_original>
// kernel: tpu_custom_call.1
$region0: #{tpu_custom_call.1}
  #allocation0 [shape = 'u32[]', space=smem, size = 0x4, offset = 0x4, fixed_abs, tag = 'smem constant byte address 0x4 - core index']
  #allocation1 [shape = 'u32[144,128]{1,0:T(1,128)}', space=vmem, size = 0x12000, scoped, tag = 'internal scratch']
  %s0 = inlined_call_operand.vmem [shape: f32[4,8], index: 0, kind: input, shape index: {}]
  %s1 = inlined_call_operand.vmem [shape: bf16[30,4], index: 1, kind: input, shape index: {}]
  %s2 = inlined_call_operand.vmem [shape: f32[30,1], index: 2, kind: input, shape index: {}]
  %s3 = inlined_call_operand.vmem [shape: bf16[25,30], index: 3, kind: input, shape index: {}]
  %s4 = inlined_call_operand.vmem [shape: f32[25,1], index: 4, kind: input, shape index: {}]
  %s5 = inlined_call_operand.vmem [shape: bf16[2,25], index: 5, kind: input, shape index: {}]
  %s6 = inlined_call_operand.vmem [shape: f32[2,1], index: 6, kind: input, shape index: {}]
  %s7 = inlined_call_operand.hbm [shape: f32[2,8], index: 7, kind: output, shape index: {}]
  %s8 = sld [smem:[#allocation0]]
  $region38: #{tpu_custom_call.1} parent=0
    _
  %s10 = ssub.s32 1, %s8
  %s11 = scalar_select 0, %s10, %s8
  $region1: #{tpu_custom_call.1} parent=0
    #allocation2 [shape = 'u8[1024]{0}', space=vmem, size = 0x400, scoped, tag = 'output window, operand 0, single buffered']
    #allocation3 [shape = 's32[1]{0}', space=sflag, size = 0x4, scoped, tag = 'scoped memory for tpu_custom_call.1']
    %12 = vsyncpa [#allocation3], 0
    // Predicated region
    $region2: #{tpu_custom_call.1} parent=1 // pred_check
      _
    $region3: #{tpu_custom_call.1} parent=1 // pred_check_branch
      %14 = sbr.rel (0) target = $region5
    $region4: #{tpu_custom_call.1} parent=1 // pred_region
      _
    $region5: #{tpu_custom_call.1} parent=1 // pred_fallthru
      _
    // Predicated region
    $region6: #{tpu_custom_call.1} parent=1 // pred_check
      _
    $region7: #{tpu_custom_call.1} parent=1 // pred_check_branch
      %16 = sbr.rel (0) target = $region9
    $region8: #{tpu_custom_call.1} parent=1 // pred_region
      _
    $region9: #{tpu_custom_call.1} parent=1 // pred_fallthru
      _
    // Predicated region
    $region10: #{tpu_custom_call.1} parent=1 // pred_check
      _
    $region11: #{tpu_custom_call.1} parent=1 // pred_check_branch
      %18 = sbr.rel (0) target = $region13
    $region12: #{tpu_custom_call.1} parent=1 // pred_region
      _
    $region13: #{tpu_custom_call.1} parent=1 // pred_fallthru
      _
    // Predicated region
    $region14: #{tpu_custom_call.1} parent=1 // pred_check
      _
    $region15: #{tpu_custom_call.1} parent=1 // pred_check_branch
      %20 = sbr.rel (0) target = $region17
    $region16: #{tpu_custom_call.1} parent=1 // pred_region
      _
    $region17: #{tpu_custom_call.1} parent=1 // pred_fallthru
      _
    // Predicated region
    $region18: #{tpu_custom_call.1} parent=1 // pred_check
      _
    $region19: #{tpu_custom_call.1} parent=1 // pred_check_branch
      %22 = sbr.rel (0) target = $region21
    $region20: #{tpu_custom_call.1} parent=1 // pred_region
      _
    $region21: #{tpu_custom_call.1} parent=1 // pred_fallthru
      _
    // Predicated region
    $region22: #{tpu_custom_call.1} parent=1 // pred_check
      _
    $region23: #{tpu_custom_call.1} parent=1 // pred_check_branch
      %24 = sbr.rel (0) target = $region25
    $region24: #{tpu_custom_call.1} parent=1 // pred_region
      _
    $region25: #{tpu_custom_call.1} parent=1 // pred_fallthru
      _
    // Predicated region
    $region26: #{tpu_custom_call.1} parent=1 // pred_check
      _
    $region27: #{tpu_custom_call.1} parent=1 // pred_check_branch
      %26 = sbr.rel (0) target = $region29
    $region28: #{tpu_custom_call.1} parent=1 // pred_region
      _
    $region29: #{tpu_custom_call.1} parent=1 // pred_fallthru
      _
    %v28 = vld [vmem:[%s0] sm:$0xf]
    %v29 = vpack.c.bf16 %v28, %v28
    %v30 = vld [vmem:[%s1] sm:$0xf]
    %v31 = vld [vmem:[%s1 + $0x4] sm:$0xf]
    %v32 = vld [vmem:[%s1 + $0x8] sm:$0xf]
    %v33 = vld [vmem:[%s1 + $0xc] sm:$0x7]
    %v34 = vld [vmem:[%s2] sm:$0xff]
    %v35 = vld [vmem:[%s2 + $0x8] sm:$0xff]
    %v36 = vld [vmem:[%s2 + $0x10] sm:$0xff]
    %v37 = vld [vmem:[%s2 + $0x18] sm:$0x3f]
    %39 = vset.pattern.permute.xlu0 0
    %40 = vperm.xlu0 %39, %v34
    %v41 = vpop.permute.xlu0 %40
    %44 = vset.pattern.permute.xlu0 0
    %45 = vperm.xlu0 %44, %v35
    %v46 = vpop.permute.xlu0 %45
    %49 = vset.pattern.permute.xlu0 0
    %50 = vperm.xlu0 %49, %v36
    %v51 = vpop.permute.xlu0 %50
    %54 = vset.pattern.permute.xlu0 0
    %55 = vperm.xlu0 %54, %v37
    %v56 = vpop.permute.xlu0 %55
    %v62 = vunpack.c.l.b16 %v30
    %v63 = vunpack.c.l.b16 %v31
    %v64 = vunpack.c.l.b16 %v32
    %v65 = vunpack.c.l.b16 %v33
    %v66 = vpack.c.b16 %v63, %v62
    %v67 = vpack.c.b16 %v65, %v64
    %vm68 = vcmask 31744
    %v70 = vsel %vm68, %v66, 0
    %v73 = vsel %vm68, %v67, 0
    %vm75 = vcmask 1041408
    %v77 = vsel %vm75, %v29, 0
    %79 = vmatprep.subr.bf16.mxu0 0
    %80 = vmatpush1.bf16.msra.mxu0 %v77
    %81 = vmatprep.subr.bf16.mxu0 0
    %82 = vmatpush1.bf16.msra.mxu0 0
    %83 = vmatprep.subr.bf16.mxu0 0
    %84 = vmatpush1.bf16.msra.mxu0 0
    %85 = vmatprep.subr.bf16.mxu0 0
    %86 = vmatpush1.bf16.msra.mxu0 0
    %87 = vmatprep.subr.bf16.mxu0 0
    %88 = vmatpush1.bf16.msra.mxu0 0
    %89 = vmatprep.subr.bf16.mxu0 0
    %90 = vmatpush1.bf16.msra.mxu0 0
    %91 = vmatprep.subr.bf16.mxu0 0
    %92 = vmatpush1.bf16.msra.mxu0 0
    %93 = vmatprep.subr.bf16.mxu0 0
    %94 = vmatpush1.bf16.msra.mxu0 0
    %95 = vmatprep.subr.bf16.mxu0 0
    %96 = vmatpush1.bf16.msra.mxu0 0
    %97 = vmatprep.subr.bf16.mxu0 0
    %98 = vmatpush1.bf16.msra.mxu0 0
    %99 = vmatprep.subr.bf16.mxu0 0
    %100 = vmatpush1.bf16.msra.mxu0 0
    %101 = vmatprep.subr.bf16.mxu0 0
    %102 = vmatpush1.bf16.msra.mxu0 0
    %103 = vmatprep.subr.bf16.mxu0 0
    %104 = vmatpush1.bf16.msra.mxu0 0
    %105 = vmatprep.subr.bf16.mxu0 0
    %106 = vmatpush1.bf16.msra.mxu0 0
    %107 = vmatprep.subr.bf16.mxu0 0
    %108 = vmatpush1.bf16.msra.mxu0 0
    %109 = vmatprep.subr.bf16.mxu0 0
    %110 = vmatpush1.bf16.msra.mxu0 0
    %111 = vmatprep.mubr.bf16.mxu0 0
    %112 = vmatmul.mubr.bf16.gmra.mrb[0].mxu0 %v70
    %v113 = vpop.f32.mrb[0].mxu0
    %v114 = vadd.f32 %v41, %v113
    %v115 = vpop.f32.mrb[0].mxu0
    %v116 = vpop.f32.mrb[0].mxu0
    %v117 = vadd.f32 %v46, %v116
    %v118 = vpop.f32.mrb[0].mxu0
    %119 = vmatprep.mubr.bf16.mxu0 0
    %120 = vmatmul.mubr.bf16.gmra.mrb[0].mxu0 %v73
    %v121 = vpop.f32.mrb[0].mxu0
    %v122 = vadd.f32 %v51, %v121
    %v123 = vpop.f32.mrb[0].mxu0
    %v124 = vpop.f32.mrb[0].mxu0
    %v125 = vadd.f32 %v56, %v124
    %v126 = vpop.f32.mrb[0].mxu0
    %127 = vdwg.mxu0
    %v128 = vmax.f32 %v114, 0.0
    %v129 = vmax.f32 %v117, 0.0
    %v130 = vmax.f32 %v122, 0.0
    %v131 = vmax.f32 %v125, 0.0
    %v132 = vpack.c.bf16 %v129, %v128
    %v133 = vpack.c.bf16 %v131, %v130
    %v134 = vld [vmem:[%s3] sm:$0xf]
    %v135 = vld [vmem:[%s3 + $0x4] sm:$0xf]
    %v136 = vld [vmem:[%s3 + $0x8] sm:$0xf]
    %v137 = vld [vmem:[%s3 + $0xc] sm:$0x1]
    %v138 = vld [vmem:[%s4] sm:$0xff]
    %v139 = vld [vmem:[%s4 + $0x8] sm:$0xff]
    %v140 = vld [vmem:[%s4 + $0x10] sm:$0xff]
    %v141 = vld [vmem:[%s4 + $0x18] sm:$0x1]
    %143 = vset.pattern.permute.xlu0 0
    %144 = vperm.xlu0 %143, %v138
    %v145 = vpop.permute.xlu0 %144
    %148 = vset.pattern.permute.xlu0 0
    %149 = vperm.xlu0 %148, %v139
    %v150 = vpop.permute.xlu0 %149
    %153 = vset.pattern.permute.xlu0 0
    %154 = vperm.xlu0 %153, %v140
    %v155 = vpop.permute.xlu0 %154
    %158 = vset.pattern.permute.xlu0 0
    %159 = vperm.xlu0 %158, %v141
    %v160 = vpop.permute.xlu0 %159
    %v166 = vunpack.c.l.b16 %v134
    %v167 = vunpack.c.l.b16 %v135
    %v168 = vunpack.c.l.b16 %v136
    %v169 = vunpack.c.l.b16 %v137
    %v170 = vpack.c.b16 %v167, %v166
    %v171 = vpack.c.b16 %v169, %v168
    %vm172 = vcmask 244736
    %v174 = vsel %vm172, %v170, 0
    %v177 = vsel %vm172, %v171, 0
    %vm179 = vcmask 1046528
    %v181 = vsel %vm179, %v133, 0
    %183 = vmatprep.subr.bf16.mxu0 0
    %184 = vmatpush1.bf16.msra.mxu0 %v132
    %185 = vmatprep.subr.bf16.mxu0 0
    %186 = vmatpush1.bf16.msra.mxu0 %v181
    %187 = vmatprep.subr.bf16.mxu0 0
    %188 = vmatpush1.bf16.msra.mxu0 0
    %189 = vmatprep.subr.bf16.mxu0 0
    %190 = vmatpush1.bf16.msra.mxu0 0
    %191 = vmatprep.subr.bf16.mxu0 0
    %192 = vmatpush1.bf16.msra.mxu0 0
    %193 = vmatprep.subr.bf16.mxu0 0
    %194 = vmatpush1.bf16.msra.mxu0 0
    %195 = vmatprep.subr.bf16.mxu0 0
    %196 = vmatpush1.bf16.msra.mxu0 0
    %197 = vmatprep.subr.bf16.mxu0 0
    %198 = vmatpush1.bf16.msra.mxu0 0
    %199 = vmatprep.subr.bf16.mxu0 0
    %200 = vmatpush1.bf16.msra.mxu0 0
    %201 = vmatprep.subr.bf16.mxu0 0
    %202 = vmatpush1.bf16.msra.mxu0 0
    %203 = vmatprep.subr.bf16.mxu0 0
    %204 = vmatpush1.bf16.msra.mxu0 0
    %205 = vmatprep.subr.bf16.mxu0 0
    %206 = vmatpush1.bf16.msra.mxu0 0
    %207 = vmatprep.subr.bf16.mxu0 0
    %208 = vmatpush1.bf16.msra.mxu0 0
    %209 = vmatprep.subr.bf16.mxu0 0
    %210 = vmatpush1.bf16.msra.mxu0 0
    %211 = vmatprep.subr.bf16.mxu0 0
    %212 = vmatpush1.bf16.msra.mxu0 0
    %213 = vmatprep.subr.bf16.mxu0 0
    %214 = vmatpush1.bf16.msra.mxu0 0
    %215 = vmatprep.mubr.bf16.mxu0 0
    %216 = vmatmul.mubr.bf16.gmra.mrb[0].mxu0 %v174
    %v217 = vpop.f32.mrb[0].mxu0
    %v218 = vadd.f32 %v145, %v217
    %v219 = vpop.f32.mrb[0].mxu0
    %v220 = vpop.f32.mrb[0].mxu0
    %v221 = vadd.f32 %v150, %v220
    %v222 = vpop.f32.mrb[0].mxu0
    %223 = vmatprep.mubr.bf16.mxu0 0
    %224 = vmatmul.mubr.bf16.gmra.mrb[0].mxu0 %v177
    %v225 = vpop.f32.mrb[0].mxu0
    %v226 = vadd.f32 %v155, %v225
    %v227 = vpop.f32.mrb[0].mxu0
    %v228 = vpop.f32.mrb[0].mxu0
    %v229 = vadd.f32 %v160, %v228
    %v230 = vpop.f32.mrb[0].mxu0
    %231 = vdwg.mxu0
    %v232 = vmax.f32 %v218, 0.0
    %v233 = vmax.f32 %v221, 0.0
    %v234 = vmax.f32 %v226, 0.0
    %v235 = vmax.f32 %v229, 0.0
    %v236 = vpack.c.bf16 %v233, %v232
    %v237 = vpack.c.bf16 %v235, %v234
    %v238 = vld [vmem:[%s5] sm:$0x1]
    %v239 = vld [vmem:[%s6] sm:$0x3]
    %241 = vset.pattern.permute.xlu0 0
    %242 = vperm.xlu0 %241, %v239
    %v243 = vpop.permute.xlu0 %242
    %vm245 = vcmask 203776
    %v247 = vsel %vm245, %v238, 0
    %vm249 = vcmask 1043456
    %vm250 = vcmask 1044480
    %v251 = vsel %vm249, 4294967295, 65535
    %v252 = vsel %vm250, %v251, 0
    %v254 = vand.u32 %v237, %v252
    %256 = vmatprep.subr.bf16.mxu0 0
    %257 = vmatpush1.bf16.msra.mxu0 %v236
    %258 = vmatprep.subr.bf16.mxu0 0
    %259 = vmatpush1.bf16.msra.mxu0 %v254
    %260 = vmatprep.subr.bf16.mxu0 0
    %261 = vmatpush1.bf16.msra.mxu0 0
    %262 = vmatprep.subr.bf16.mxu0 0
    %263 = vmatpush1.bf16.msra.mxu0 0
    %264 = vmatprep.subr.bf16.mxu0 0
    %265 = vmatpush1.bf16.msra.mxu0 0
    %266 = vmatprep.subr.bf16.mxu0 0
    %267 = vmatpush1.bf16.msra.mxu0 0
    %268 = vmatprep.subr.bf16.mxu0 0
    %269 = vmatpush1.bf16.msra.mxu0 0
    %270 = vmatprep.subr.bf16.mxu0 0
    %271 = vmatpush1.bf16.msra.mxu0 0
    %272 = vmatprep.subr.bf16.mxu0 0
    %273 = vmatpush1.bf16.msra.mxu0 0
    %274 = vmatprep.subr.bf16.mxu0 0
    %275 = vmatpush1.bf16.msra.mxu0 0
    %276 = vmatprep.subr.bf16.mxu0 0
    %277 = vmatpush1.bf16.msra.mxu0 0
    %278 = vmatprep.subr.bf16.mxu0 0
    %279 = vmatpush1.bf16.msra.mxu0 0
    %280 = vmatprep.subr.bf16.mxu0 0
    %281 = vmatpush1.bf16.msra.mxu0 0
    %282 = vmatprep.subr.bf16.mxu0 0
    %283 = vmatpush1.bf16.msra.mxu0 0
    %284 = vmatprep.subr.bf16.mxu0 0
    %285 = vmatpush1.bf16.msra.mxu0 0
    %286 = vmatprep.subr.bf16.mxu0 0
    %287 = vmatpush1.bf16.msra.mxu0 0
    %288 = vmatprep.mubr.bf16.mxu0 0
    %289 = vmatmul.mubr.bf16.gmra.mrb[0].mxu0 %v247
    %v290 = vpop.f32.mrb[0].mxu0
    %v291 = vadd.f32 %v243, %v290
    %v292 = vpop.f32.mrb[0].mxu0
    %v293 = vpop.f32.mrb[0].mxu0
    %v294 = vpop.f32.mrb[0].mxu0
    %295 = vdwg.mxu0
    %vm296 = vcmask 58368
    %297 = vst.msk [vmem:[#allocation2] sm:$0x3] %vm296, %v291
    // Predicated region
    $region30: #{tpu_custom_call.1} parent=1 // pred_check
      _
    $region31: #{tpu_custom_call.1} parent=1 // pred_check_branch
      %299 = sbr.rel (0) target = $region33
    $region32: #{tpu_custom_call.1} parent=1 // pred_region
      %s301 = ssub.s32 32, 32
      %302 = vsyncadd [#allocation3], %s301
      %s304 = sshll.u32 [#allocation2], 4
      %s305 = int_to_ptr.vmem [resolvable:$true] %s304
      %307 = dma.vmem_to_hbm [thread:$0]  %s305, 32, %s7, [#allocation3]
    $region33: #{tpu_custom_call.1} parent=1 // pred_fallthru
      _
    // Predicated region
    $region34: #{tpu_custom_call.1} parent=1 // pred_check
      _
    $region35: #{tpu_custom_call.1} parent=1 // pred_check_branch
      %309 = sbr.rel (0) target = $region37
    $region36: #{tpu_custom_call.1} parent=1 // pred_region
      %310 = dma.done [#allocation3], 32
    $region37: #{tpu_custom_call.1} parent=1 // pred_fallthru
      _
    %311 = vsyncpa [#allocation3], 1

</llo_original>
